<compile_context>
chip_gen: v7x
topology: tpu7x:2x2x1
jax: 0.10.0
libtpu: 0.0.40
codegen_flags: <defaults>
</compile_context>

<pallas_src>
import functools

import jax
import jax.numpy as jnp
import numpy as np
from jax.experimental import pallas as pl
from jax.experimental.pallas import tpu as pltpu


def _round_up(x, m):
    return (x + m - 1) // m * m


def _dw_pw_kernel(x_ref, dww_ref, pww_ref, fb_ref, o_ref, *,
                  K, stride, HO, WO, CP, NOUTP):
    # x_ref  : (1, stride*stride, HOP, WOP, CP)  phase-decimated padded input
    # dww_ref: (K*K, CP)     depthwise weights, tap-major, channels on lanes
    # pww_ref: (CP, NOUTP)   pointwise weights
    # fb_ref : (1, NOUTP)    fused bias = dw_b @ pw_w + pw_b
    # o_ref  : (1, HO*WO, NOUTP)
    #
    # Depthwise 3x3 stride-2: each tap is a contiguous slice of its phase.
    # Accumulator is (HO*WO, CP) f32; at realistic sizes keep HO*WO tiled so
    # this stays well under the vreg file (here 64x128xf32 = 32 KiB).
    acc = jnp.zeros((HO * WO, CP), jnp.float32)
    for kh in range(K):
        for kw in range(K):
            ph = (kh % stride) * stride + (kw % stride)   # which phase
            oh = kh // stride                             # intra-phase offset
            ow = kw // stride
            patch = x_ref[0, ph, oh:oh + HO, ow:ow + WO, :]        # (HO, WO, CP)
            w_tap = dww_ref[kh * K + kw:kh * K + kw + 1, :]        # (1, CP)
            acc = acc + (patch.reshape(HO * WO, CP).astype(jnp.float32)
                         * w_tap.astype(jnp.float32))

    # Pointwise 1x1 conv == matmul over channels (MXU), lane-dense N dim.
    # TODO(synk): optionally cast operands to bf16 for v6e/v7x MXU throughput
    # (keep preferred_element_type=f32); kept f32 here to match the reference.
    out = jnp.dot(acc, pww_ref[...].astype(jnp.float32),
                  preferred_element_type=jnp.float32)
    out = out + fb_ref[...].astype(jnp.float32)                    # (1, NOUTP)
    o_ref[0] = out.astype(o_ref.dtype)


def dw_conv_pallas(x_nchw, dw_w, dw_b, pw_w, pw_b, *, stride=2, K=3, pad=1):
    """x_nchw: (N, C, H, W); dw_w: (C,1,K,K); dw_b: (C,); pw_w: (NOUT,C,1,1); pw_b: (NOUT,)."""
    N, C, H, W = x_nchw.shape
    NOUT = pw_w.shape[0]
    HO = (H + 2 * pad - K) // stride + 1
    WO = (W + 2 * pad - K) // stride + 1
    off = (K - 1) // stride            # max intra-phase tap offset
    HOP, WOP = HO + off, WO + off      # per-phase spatial extent
    CP = _round_up(C, 128)             # lane-pad input channels
    NOUTP = _round_up(NOUT, 128)       # lane-pad output channels
    Hp, Wp = H + 2 * pad, W + 2 * pad
    th, tw = stride * HOP, stride * WOP

    # --- glue: layout conversion + padding + phase decimation (plain JAX) ---
    x = jnp.transpose(x_nchw, (0, 2, 3, 1))                              # NHWC
    x = jnp.pad(x, ((0, 0), (pad, pad), (pad, pad), (0, CP - C)))        # spatial + channel pad
    x = jnp.pad(x, ((0, 0), (0, max(0, th - Hp)), (0, max(0, tw - Wp)), (0, 0)))
    x = x[:, :th, :tw, :]
    # Decimate into the stride*stride phases: phase p = (r%s)*s + (c%s),
    # phase[i, j] = padded[i*s + r%s, j*s + c%s].
    x = x.reshape(N, HOP, stride, WOP, stride, CP)
    x = jnp.transpose(x, (0, 2, 4, 1, 3, 5)).reshape(N, stride * stride, HOP, WOP, CP)

    # Weight repacking (glue).
    dww = jnp.transpose(dw_w[:, 0], (1, 2, 0)).reshape(K * K, C)         # (K*K, C) tap-major
    dww = jnp.pad(dww, ((0, 0), (0, CP - C)))
    pww = jnp.transpose(pw_w[:, :, 0, 0], (1, 0))                        # (C, NOUT)
    pww = jnp.pad(pww, ((0, CP - C), (0, NOUTP - NOUT)))                 # (CP, NOUTP)
    # Fold the depthwise bias through the linear pointwise conv.
    fb = dw_b.reshape(1, C) @ pww[:C, :] \
        + jnp.pad(pw_b, (0, NOUTP - NOUT)).reshape(1, NOUTP)             # (1, NOUTP)

    kernel = functools.partial(_dw_pw_kernel, K=K, stride=stride,
                               HO=HO, WO=WO, CP=CP, NOUTP=NOUTP)

    out = pl.pallas_call(
        kernel,
        out_shape=jax.ShapeDtypeStruct((N, HO * WO, NOUTP), x_nchw.dtype),
        grid=(N,),
        in_specs=[
            pl.BlockSpec((1, stride * stride, HOP, WOP, CP),
                         lambda b: (b, 0, 0, 0, 0)),
            pl.BlockSpec((K * K, CP), lambda b: (0, 0)),
            pl.BlockSpec((CP, NOUTP), lambda b: (0, 0)),
            pl.BlockSpec((1, NOUTP), lambda b: (0, 0)),
        ],
        out_specs=pl.BlockSpec((1, HO * WO, NOUTP), lambda b: (b, 0, 0)),
        compiler_params=pltpu.CompilerParams(
            dimension_semantics=("parallel",),          # batch is independent
            vmem_limit_bytes=32 * 1024 * 1024),
    )(x, dww, pww, fb)

    # Glue: drop channel padding, restore spatial dims, back to NCHW.
    out = out[:, :, :NOUT].reshape(N, HO, WO, NOUT)
    return jnp.transpose(out, (0, 3, 1, 2))


def _reference(x_nchw, dw_w, dw_b, pw_w, pw_b, *, stride=2, pad=1):
    C = x_nchw.shape[1]
    out = jax.lax.conv_general_dilated(
        x_nchw, dw_w, window_strides=(stride, stride),
        padding=((pad, pad), (pad, pad)),
        dimension_numbers=("NCHW", "OIHW", "NCHW"),
        feature_group_count=C)
    out = out + dw_b.reshape(1, -1, 1, 1)
    out = jax.lax.conv_general_dilated(
        out, pw_w, window_strides=(1, 1), padding="VALID",
        dimension_numbers=("NCHW", "OIHW", "NCHW"))
    out = out + pw_b.reshape(1, -1, 1, 1)
    return out


if __name__ == "__main__":
    N, NIN, NOUT, H, W = 2, 4, 8, 16, 16
    K, STRIDE, PAD = 3, 2, 1

    key = jax.random.PRNGKey(0)
    k1, k2, k3, k4, k5 = jax.random.split(key, 5)

    # Deterministic parameter init (uniform +-1/sqrt(fan_in), like PyTorch defaults).
    dw_bound = 1.0 / np.sqrt(1 * K * K)
    pw_bound = 1.0 / np.sqrt(NIN * 1 * 1)
    dw_w = jax.random.uniform(k1, (NIN, 1, K, K), jnp.float32, -dw_bound, dw_bound)
    dw_b = jax.random.uniform(k2, (NIN,), jnp.float32, -dw_bound, dw_bound)
    pw_w = jax.random.uniform(k3, (NOUT, NIN, 1, 1), jnp.float32, -pw_bound, pw_bound)
    pw_b = jax.random.uniform(k4, (NOUT,), jnp.float32, -pw_bound, pw_bound)

    x = jax.random.normal(k5, (N, NIN, H, W), jnp.float32)

    out = dw_conv_pallas(x, dw_w, dw_b, pw_w, pw_b, stride=STRIDE, K=K, pad=PAD)
    out = jax.block_until_ready(out)

    ref = _reference(x, dw_w, dw_b, pw_w, pw_b, stride=STRIDE, pad=PAD)
    np.testing.assert_allclose(np.asarray(out), np.asarray(ref),
                               rtol=1e-4, atol=1e-4)
    assert out.shape == (N, NOUT, H // STRIDE, W // STRIDE)
    print("KERNEL_OK")
</pallas_src>

<mosaic_0001>
module attributes {stable_mosaic.version = 11 : i64} {
  func.func @_dw_pw_kernel(%arg0: i32, %arg1: memref<1x4x9x9x128xf32, #tpu.memory_space<vmem>>, %arg2: memref<9x128xf32, #tpu.memory_space<vmem>>, %arg3: memref<128x128xf32, #tpu.memory_space<vmem>>, %arg4: memref<1x128xf32, #tpu.memory_space<vmem>>, %arg5: memref<1x64x128xf32, #tpu.memory_space<vmem>>) attributes {dimension_semantics = [#tpu.dimension_semantics<parallel>], iteration_bounds = array<i64: 2>, scalar_prefetch = 0 : i64, scratch_operands = 0 : i64, tpu.core_type = #tpu.core_type<tc>, window_params = [{transform_indices = @transform_0, window_bounds = array<i64: 1, 4, 9, 9, 128>}, {pipeline_mode = #tpu.pipeline_mode<synchronous>, transform_indices = @transform_1, window_bounds = array<i64: 9, 128>}, {pipeline_mode = #tpu.pipeline_mode<synchronous>, transform_indices = @transform_2, window_bounds = array<i64: 128, 128>}, {pipeline_mode = #tpu.pipeline_mode<synchronous>, transform_indices = @transform_3, window_bounds = array<i64: 1, 128>}, {transform_indices = @transform_4, window_bounds = array<i64: 1, 64, 128>}]} {
    %cst = arith.constant 0.000000e+00 : f32
    %0 = vector.broadcast %cst : f32 to vector<64x128xf32>
    %c0 = arith.constant 0 : index
    %c0_0 = arith.constant 0 : index
    %c0_1 = arith.constant 0 : index
    %c0_2 = arith.constant 0 : index
    %c0_3 = arith.constant 0 : index
    %1 = vector.load %arg1[%c0, %c0_0, %c0_1, %c0_2, %c0_3] : memref<1x4x9x9x128xf32, #tpu.memory_space<vmem>>, vector<1x1x8x8x128xf32>
    %2 = vector.shape_cast %1 : vector<1x1x8x8x128xf32> to vector<8x8x128xf32>
    %c0_4 = arith.constant 0 : index
    %c0_5 = arith.constant 0 : index
    %3 = vector.load %arg2[%c0_4, %c0_5] : memref<9x128xf32, #tpu.memory_space<vmem>>, vector<1x128xf32>
    %4 = vector.shape_cast %2 : vector<8x8x128xf32> to vector<64x128xf32>
    %5 = vector.broadcast %3 : vector<1x128xf32> to vector<64x128xf32>
    %6 = arith.mulf %4, %5 : vector<64x128xf32>
    %7 = arith.addf %0, %6 : vector<64x128xf32>
    %c0_6 = arith.constant 0 : index
    %c1 = arith.constant 1 : index
    %c0_7 = arith.constant 0 : index
    %c0_8 = arith.constant 0 : index
    %c0_9 = arith.constant 0 : index
    %8 = vector.load %arg1[%c0_6, %c1, %c0_7, %c0_8, %c0_9] : memref<1x4x9x9x128xf32, #tpu.memory_space<vmem>>, vector<1x1x8x8x128xf32>
    %9 = vector.shape_cast %8 : vector<1x1x8x8x128xf32> to vector<8x8x128xf32>
    %c1_10 = arith.constant 1 : index
    %c0_11 = arith.constant 0 : index
    %10 = vector.load %arg2[%c1_10, %c0_11] : memref<9x128xf32, #tpu.memory_space<vmem>>, vector<1x128xf32>
    %11 = vector.shape_cast %9 : vector<8x8x128xf32> to vector<64x128xf32>
    %12 = vector.broadcast %10 : vector<1x128xf32> to vector<64x128xf32>
    %13 = arith.mulf %11, %12 : vector<64x128xf32>
    %14 = arith.addf %7, %13 : vector<64x128xf32>
    %c0_12 = arith.constant 0 : index
    %c0_13 = arith.constant 0 : index
    %c0_14 = arith.constant 0 : index
    %c1_15 = arith.constant 1 : index
    %c0_16 = arith.constant 0 : index
    %15 = vector.load %arg1[%c0_12, %c0_13, %c0_14, %c1_15, %c0_16] : memref<1x4x9x9x128xf32, #tpu.memory_space<vmem>>, vector<1x1x8x8x128xf32>
    %16 = vector.shape_cast %15 : vector<1x1x8x8x128xf32> to vector<8x8x128xf32>
    %c2 = arith.constant 2 : index
    %c0_17 = arith.constant 0 : index
    %17 = vector.load %arg2[%c2, %c0_17] : memref<9x128xf32, #tpu.memory_space<vmem>>, vector<1x128xf32>
    %18 = vector.shape_cast %16 : vector<8x8x128xf32> to vector<64x128xf32>
    %19 = vector.broadcast %17 : vector<1x128xf32> to vector<64x128xf32>
    %20 = arith.mulf %18, %19 : vector<64x128xf32>
    %21 = arith.addf %14, %20 : vector<64x128xf32>
    %c0_18 = arith.constant 0 : index
    %c2_19 = arith.constant 2 : index
    %c0_20 = arith.constant 0 : index
    %c0_21 = arith.constant 0 : index
    %c0_22 = arith.constant 0 : index
    %22 = vector.load %arg1[%c0_18, %c2_19, %c0_20, %c0_21, %c0_22] : memref<1x4x9x9x128xf32, #tpu.memory_space<vmem>>, vector<1x1x8x8x128xf32>
    %23 = vector.shape_cast %22 : vector<1x1x8x8x128xf32> to vector<8x8x128xf32>
    %c3 = arith.constant 3 : index
    %c0_23 = arith.constant 0 : index
    %24 = vector.load %arg2[%c3, %c0_23] : memref<9x128xf32, #tpu.memory_space<vmem>>, vector<1x128xf32>
    %25 = vector.shape_cast %23 : vector<8x8x128xf32> to vector<64x128xf32>
    %26 = vector.broadcast %24 : vector<1x128xf32> to vector<64x128xf32>
    %27 = arith.mulf %25, %26 : vector<64x128xf32>
    %28 = arith.addf %21, %27 : vector<64x128xf32>
    %c0_24 = arith.constant 0 : index
    %c3_25 = arith.constant 3 : index
    %c0_26 = arith.constant 0 : index
    %c0_27 = arith.constant 0 : index
    %c0_28 = arith.constant 0 : index
    %29 = vector.load %arg1[%c0_24, %c3_25, %c0_26, %c0_27, %c0_28] : memref<1x4x9x9x128xf32, #tpu.memory_space<vmem>>, vector<1x1x8x8x128xf32>
    %30 = vector.shape_cast %29 : vector<1x1x8x8x128xf32> to vector<8x8x128xf32>
    %c4 = arith.constant 4 : index
    %c0_29 = arith.constant 0 : index
    %31 = vector.load %arg2[%c4, %c0_29] : memref<9x128xf32, #tpu.memory_space<vmem>>, vector<1x128xf32>
    %32 = vector.shape_cast %30 : vector<8x8x128xf32> to vector<64x128xf32>
    %33 = vector.broadcast %31 : vector<1x128xf32> to vector<64x128xf32>
    %34 = arith.mulf %32, %33 : vector<64x128xf32>
    %35 = arith.addf %28, %34 : vector<64x128xf32>
    %c0_30 = arith.constant 0 : index
    %c2_31 = arith.constant 2 : index
    %c0_32 = arith.constant 0 : index
    %c1_33 = arith.constant 1 : index
    %c0_34 = arith.constant 0 : index
    %36 = vector.load %arg1[%c0_30, %c2_31, %c0_32, %c1_33, %c0_34] : memref<1x4x9x9x128xf32, #tpu.memory_space<vmem>>, vector<1x1x8x8x128xf32>
    %37 = vector.shape_cast %36 : vector<1x1x8x8x128xf32> to vector<8x8x128xf32>
    %c5 = arith.constant 5 : index
    %c0_35 = arith.constant 0 : index
    %38 = vector.load %arg2[%c5, %c0_35] : memref<9x128xf32, #tpu.memory_space<vmem>>, vector<1x128xf32>
    %39 = vector.shape_cast %37 : vector<8x8x128xf32> to vector<64x128xf32>
    %40 = vector.broadcast %38 : vector<1x128xf32> to vector<64x128xf32>
    %41 = arith.mulf %39, %40 : vector<64x128xf32>
    %42 = arith.addf %35, %41 : vector<64x128xf32>
    %c0_36 = arith.constant 0 : index
    %c0_37 = arith.constant 0 : index
    %c1_38 = arith.constant 1 : index
    %c0_39 = arith.constant 0 : index
    %c0_40 = arith.constant 0 : index
    %43 = vector.load %arg1[%c0_36, %c0_37, %c1_38, %c0_39, %c0_40] : memref<1x4x9x9x128xf32, #tpu.memory_space<vmem>>, vector<1x1x8x8x128xf32>
    %44 = vector.shape_cast %43 : vector<1x1x8x8x128xf32> to vector<8x8x128xf32>
    %c6 = arith.constant 6 : index
    %c0_41 = arith.constant 0 : index
    %45 = vector.load %arg2[%c6, %c0_41] : memref<9x128xf32, #tpu.memory_space<vmem>>, vector<1x128xf32>
    %46 = vector.shape_cast %44 : vector<8x8x128xf32> to vector<64x128xf32>
    %47 = vector.broadcast %45 : vector<1x128xf32> to vector<64x128xf32>
    %48 = arith.mulf %46, %47 : vector<64x128xf32>
    %49 = arith.addf %42, %48 : vector<64x128xf32>
    %c0_42 = arith.constant 0 : index
    %c1_43 = arith.constant 1 : index
    %c1_44 = arith.constant 1 : index
    %c0_45 = arith.constant 0 : index
    %c0_46 = arith.constant 0 : index
    %50 = vector.load %arg1[%c0_42, %c1_43, %c1_44, %c0_45, %c0_46] : memref<1x4x9x9x128xf32, #tpu.memory_space<vmem>>, vector<1x1x8x8x128xf32>
    %51 = vector.shape_cast %50 : vector<1x1x8x8x128xf32> to vector<8x8x128xf32>
    %c7 = arith.constant 7 : index
    %c0_47 = arith.constant 0 : index
    %52 = vector.load %arg2[%c7, %c0_47] : memref<9x128xf32, #tpu.memory_space<vmem>>, vector<1x128xf32>
    %53 = vector.shape_cast %51 : vector<8x8x128xf32> to vector<64x128xf32>
    %54 = vector.broadcast %52 : vector<1x128xf32> to vector<64x128xf32>
    %55 = arith.mulf %53, %54 : vector<64x128xf32>
    %56 = arith.addf %49, %55 : vector<64x128xf32>
    %c0_48 = arith.constant 0 : index
    %c0_49 = arith.constant 0 : index
    %c1_50 = arith.constant 1 : index
    %c1_51 = arith.constant 1 : index
    %c0_52 = arith.constant 0 : index
    %57 = vector.load %arg1[%c0_48, %c0_49, %c1_50, %c1_51, %c0_52] : memref<1x4x9x9x128xf32, #tpu.memory_space<vmem>>, vector<1x1x8x8x128xf32>
    %58 = vector.shape_cast %57 : vector<1x1x8x8x128xf32> to vector<8x8x128xf32>
    %c8 = arith.constant 8 : index
    %c0_53 = arith.constant 0 : index
    %59 = vector.load %arg2[%c8, %c0_53] : memref<9x128xf32, #tpu.memory_space<vmem>>, vector<1x128xf32>
    %60 = vector.shape_cast %58 : vector<8x8x128xf32> to vector<64x128xf32>
    %61 = vector.broadcast %59 : vector<1x128xf32> to vector<64x128xf32>
    %62 = arith.mulf %60, %61 : vector<64x128xf32>
    %63 = arith.addf %56, %62 : vector<64x128xf32>
    %c0_54 = arith.constant 0 : index
    %c0_55 = arith.constant 0 : index
    %64 = vector.load %arg3[%c0_54, %c0_55] : memref<128x128xf32, #tpu.memory_space<vmem>>, vector<128x128xf32>
    %cst_56 = arith.constant dense<0.000000e+00> : vector<64x128xf32>
    %65 = tpu.matmul %63, %64, %cst_56 {dimension_numbers = #tpu.dot_dimension_numbers<[1], [0], [0], [1], [0, 0, 1, 1], [], []>} : vector<64x128xf32>, vector<128x128xf32>, vector<64x128xf32> -> vector<64x128xf32>
    %c0_57 = arith.constant 0 : index
    %c0_58 = arith.constant 0 : index
    %66 = vector.load %arg4[%c0_57, %c0_58] : memref<1x128xf32, #tpu.memory_space<vmem>>, vector<1x128xf32>
    %67 = vector.broadcast %66 : vector<1x128xf32> to vector<64x128xf32>
    %68 = arith.addf %65, %67 : vector<64x128xf32>
    %c0_59 = arith.constant 0 : index
    %c0_60 = arith.constant 0 : index
    %c0_61 = arith.constant 0 : index
    %69 = vector.load %arg5[%c0_59, %c0_60, %c0_61] : memref<1x64x128xf32, #tpu.memory_space<vmem>>, vector<1x64x128xf32>
    %70 = vector.shape_cast %69 : vector<1x64x128xf32> to vector<64x128xf32>
    %71 = vector.shape_cast %68 : vector<64x128xf32> to vector<1x64x128xf32>
    tpu.vector_store %arg5[%c0_59, %c0_60, %c0_61], %71 {strides = array<i32>} : memref<1x64x128xf32, #tpu.memory_space<vmem>>, vector<1x64x128xf32>,
    return
  }
  func.func @transform_0(%arg0: i32) -> (i32, i32, i32, i32, i32) {
    %c0_i32 = arith.constant 0 : i32
    %c0_i32_0 = arith.constant 0 : i32
    %c0_i32_1 = arith.constant 0 : i32
    %c0_i32_2 = arith.constant 0 : i32
    %c0_i32_3 = arith.constant 0 : i32
    return %arg0, %c0_i32, %c0_i32_0, %c0_i32_1, %c0_i32_2 : i32, i32, i32, i32, i32
  }
  func.func @transform_1(%arg0: i32) -> (i32, i32) {
    %c0_i32 = arith.constant 0 : i32
    %c0_i32_0 = arith.constant 0 : i32
    %c0_i32_1 = arith.constant 0 : i32
    return %c0_i32, %c0_i32_0 : i32, i32
  }
  func.func @transform_2(%arg0: i32) -> (i32, i32) {
    %c0_i32 = arith.constant 0 : i32
    %c0_i32_0 = arith.constant 0 : i32
    %c0_i32_1 = arith.constant 0 : i32
    return %c0_i32, %c0_i32_0 : i32, i32
  }
  func.func @transform_3(%arg0: i32) -> (i32, i32) {
    %c0_i32 = arith.constant 0 : i32
    %c0_i32_0 = arith.constant 0 : i32
    %c0_i32_1 = arith.constant 0 : i32
    return %c0_i32, %c0_i32_0 : i32, i32
  }
  func.func @transform_4(%arg0: i32) -> (i32, i32, i32) {
    %c0_i32 = arith.constant 0 : i32
    %c0_i32_0 = arith.constant 0 : i32
    %c0_i32_1 = arith.constant 0 : i32
    return %arg0, %c0_i32, %c0_i32_0 : i32, i32, i32
  }
}

</mosaic_0001>

<llo_original>
// kernel: tpu_custom_call.1
$region0: #{tpu_custom_call.1}
  #allocation0 [shape = 'u32[]', space=smem, size = 0x4, offset = 0x4, fixed_abs, tag = 'smem constant byte address 0x4 - core index']
  #allocation1 [shape = 'u32[144,128]{1,0:T(1,128)}', space=vmem, size = 0x12000, scoped, tag = 'internal scratch']
  %s0 = inlined_call_operand.vmem [shape: f32[2,4,9,9,128], index: 0, kind: input, shape index: {}]
  %s1 = inlined_call_operand.vmem [shape: f32[9,128], index: 1, kind: input, shape index: {}]
  %s2 = inlined_call_operand.vmem [shape: f32[128,128], index: 2, kind: input, shape index: {}]
  %s3 = inlined_call_operand.vmem [shape: f32[1,128], index: 3, kind: input, shape index: {}]
  %s4 = inlined_call_operand.hbm [shape: f32[2,64,128], index: 4, kind: output, shape index: {}]
  %s5 = sld [smem:[#allocation0]]
  $region49: #{tpu_custom_call.1} parent=0
    _
  %s7 = ssub.s32 1, %s5
  %s8 = scalar_select 0, %s7, %s5
  $region1: #{tpu_custom_call.1} parent=0
    #allocation2 [shape = 'u8[65536]{0}', space=vmem, size = 0x10000, scoped, tag = 'output window, operand 0']
    #allocation3 [shape = 's32[2]{0}', space=sflag, size = 0x8, scoped, tag = 'scoped memory for tpu_custom_call.1']
    %9 = vsyncpa [#allocation3], 0
    %s10 = scalar_lea.sflag [#allocation3], 1
    %11 = vsyncpa %s10, 0
    loop: start=0, step=1, limit=4
    $region2: #{tpu_custom_call.1} parent=1 // loop_pre_header
      _
    $region3: #{tpu_custom_call.1} parent=1 // loop_header
      %s13 = sphi 0, %s17
      %p14 = scmp.ge.s32.totalorder %s13, 4
      %s23 = sphi 0, %s25
      %s26 = sphi 0, %s23
      %s27 = sphi 0, %s26
      %s43 = sphi 0, %s27
      %s47 = sphi 0, %s47
      %s49 = sphi 0, %s47
      %s50 = sphi 0, %s49
      %s64 = sphi 0, %s50
      %s68 = sphi 0, %s68
      %s70 = sphi 0, %s68
      %s71 = sphi 0, %s70
      %s85 = sphi 0, %s71
      %s89 = sphi 0, %s89
      %s91 = sphi 0, %s89
      %s92 = sphi 0, %s91
      %s106 = sphi 0, %s92
      %s112 = sphi 0, %s114
      %s115 = sphi 0, %s112
      %s116 = sphi 0, %s115
      %s132 = sphi 0, %s116
    $region4: #{tpu_custom_call.1} parent=1 // loop_header_branch
      %16 = sbr.rel (%p14) target = $region8
    $region5: #{tpu_custom_call.1} parent=1 // loop_body
      %s18 = ssub.s32 %s13, 1
      %s19 = ssub.s32 %s13, 2
      %s20 = sadd.s32 %s13, 1
      %s21 = ssub.s32 %s13, %s20
      %p22 = scmp.eq.s32.totalorder %s21, 0
      %s24 = sadd.s32 %s23, 1
      %s25 = scalar_select %p22, %s23, %s24
      %p28 = pneg %p22
      %p29 = scmp.eq.s32.totalorder %s13, 1
      %p30 = por %p28, %p29
      %p31 = scmp.ne.s32.totalorder %s23, %s26
      %p32 = scmp.eq.s32.totalorder %s13, 0
      %p33 = por %p31, %p32
      %p34 = scmp.ne.s32.totalorder %s23, %s26
      %p35 = scmp.eq.s32.totalorder %s18, 1
      %p36 = por %p34, %p35
      %p37 = scmp.ne.s32.totalorder %s26, %s27
      %p38 = scmp.eq.s32.totalorder %s18, 0
      %p39 = por %p37, %p38
      %p40 = scmp.ne.s32.totalorder %s26, %s27
      %p41 = scmp.eq.s32.totalorder %s19, 1
      %p42 = por %p40, %p41
      %p44 = scmp.ne.s32.totalorder %s27, %s43
      %p45 = scmp.eq.s32.totalorder %s19, 0
      %p46 = por %p44, %p45
      %s48 = sadd.s32 %s47, 1
      %p51 = scmp.eq.s32.totalorder %s13, 1
      %p52 = scmp.ne.s32.totalorder %s47, %s49
      %p53 = scmp.eq.s32.totalorder %s13, 0
      %p54 = por %p52, %p53
      %p55 = scmp.ne.s32.totalorder %s47, %s49
      %p56 = scmp.eq.s32.totalorder %s18, 1
      %p57 = por %p55, %p56
      %p58 = scmp.ne.s32.totalorder %s49, %s50
      %p59 = scmp.eq.s32.totalorder %s18, 0
      %p60 = por %p58, %p59
      %p61 = scmp.ne.s32.totalorder %s49, %s50
      %p62 = scmp.eq.s32.totalorder %s19, 1
      %p63 = por %p61, %p62
      %p65 = scmp.ne.s32.totalorder %s50, %s64
      %p66 = scmp.eq.s32.totalorder %s19, 0
      %p67 = por %p65, %p66
      %s69 = sadd.s32 %s68, 1
      %p72 = scmp.eq.s32.totalorder %s13, 1
      %p73 = scmp.ne.s32.totalorder %s68, %s70
      %p74 = scmp.eq.s32.totalorder %s13, 0
      %p75 = por %p73, %p74
      %p76 = scmp.ne.s32.totalorder %s68, %s70
      %p77 = scmp.eq.s32.totalorder %s18, 1
      %p78 = por %p76, %p77
      %p79 = scmp.ne.s32.totalorder %s70, %s71
      %p80 = scmp.eq.s32.totalorder %s18, 0
      %p81 = por %p79, %p80
      %p82 = scmp.ne.s32.totalorder %s70, %s71
      %p83 = scmp.eq.s32.totalorder %s19, 1
      %p84 = por %p82, %p83
      %p86 = scmp.ne.s32.totalorder %s71, %s85
      %p87 = scmp.eq.s32.totalorder %s19, 0
      %p88 = por %p86, %p87
      %s90 = sadd.s32 %s89, 1
      %p93 = scmp.eq.s32.totalorder %s13, 1
      %p94 = scmp.ne.s32.totalorder %s89, %s91
      %p95 = scmp.eq.s32.totalorder %s13, 0
      %p96 = por %p94, %p95
      %p97 = scmp.ne.s32.totalorder %s89, %s91
      %p98 = scmp.eq.s32.totalorder %s18, 1
      %p99 = por %p97, %p98
      %p100 = scmp.ne.s32.totalorder %s91, %s92
      %p101 = scmp.eq.s32.totalorder %s18, 0
      %p102 = por %p100, %p101
      %p103 = scmp.ne.s32.totalorder %s91, %s92
      %p104 = scmp.eq.s32.totalorder %s19, 1
      %p105 = por %p103, %p104
      %p107 = scmp.ne.s32.totalorder %s92, %s106
      %p108 = scmp.eq.s32.totalorder %s19, 0
      %p109 = por %p107, %p108
      %s110 = ssub.s32 %s13, %s20
      %p111 = scmp.eq.s32.totalorder %s110, 0
      %s113 = sadd.s32 %s112, 1
      %s114 = scalar_select %p111, %s112, %s113
      %p117 = pneg %p111
      %p118 = scmp.eq.s32.totalorder %s13, 1
      %p119 = por %p117, %p118
      %p120 = scmp.ne.s32.totalorder %s112, %s115
      %p121 = scmp.eq.s32.totalorder %s13, 0
      %p122 = por %p120, %p121
      %p123 = scmp.ne.s32.totalorder %s112, %s115
      %p124 = scmp.eq.s32.totalorder %s18, 1
      %p125 = por %p123, %p124
      %p126 = scmp.ne.s32.totalorder %s115, %s116
      %p127 = scmp.eq.s32.totalorder %s18, 0
      %p128 = por %p126, %p127
      %p129 = scmp.ne.s32.totalorder %s115, %s116
      %p130 = scmp.eq.s32.totalorder %s19, 1
      %p131 = por %p129, %p130
      %p133 = scmp.ne.s32.totalorder %s116, %s132
      %p134 = scmp.eq.s32.totalorder %s19, 0
      %p135 = por %p133, %p134
      %p136 = scmp.le.s32.totalorder 1, %s13
      %p137 = scmp.lt.s32.totalorder %s13, 3
      %p138 = pnand %p136, %p137
      %p139 = pneg %p138
      // Predicated region
      $region9: #{tpu_custom_call.1} parent=5 // pred_check
        _
      $region10: #{tpu_custom_call.1} parent=5 // pred_check_branch
        %141 = sbr.rel (%p138) target = $region12
      $region11: #{tpu_custom_call.1} parent=5 // pred_region
        %s142 = ssub.s32 %s13, 1
        // Predicated region
        $region13: #{tpu_custom_call.1} parent=11 // pred_check
          %p143 = pneg %p60
        $region14: #{tpu_custom_call.1} parent=11 // pred_check_branch
          %145 = sbr.rel (%p143) target = $region16
        $region15: #{tpu_custom_call.1} parent=11 // pred_region
          _
        $region16: #{tpu_custom_call.1} parent=11 // pred_fallthru
          _
        // Predicated region
        $region17: #{tpu_custom_call.1} parent=11 // pred_check
          %p146 = pneg %p81
        $region18: #{tpu_custom_call.1} parent=11 // pred_check_branch
          %148 = sbr.rel (%p146) target = $region20
        $region19: #{tpu_custom_call.1} parent=11 // pred_region
          _
        $region20: #{tpu_custom_call.1} parent=11 // pred_fallthru
          _
        // Predicated region
        $region21: #{tpu_custom_call.1} parent=11 // pred_check
          %p149 = pneg %p102
        $region22: #{tpu_custom_call.1} parent=11 // pred_check_branch
          %151 = sbr.rel (%p149) target = $region24
        $region23: #{tpu_custom_call.1} parent=11 // pred_region
          _
        $region24: #{tpu_custom_call.1} parent=11 // pred_fallthru
          _
      $region12: #{tpu_custom_call.1} parent=5 // pred_fallthru
        _
      %p152 = scmp.lt.s32.totalorder %s13, 2
      // Predicated region
      $region25: #{tpu_custom_call.1} parent=5 // pred_check
        %p153 = pneg %p152
      $region26: #{tpu_custom_call.1} parent=5 // pred_check_branch
        %155 = sbr.rel (%p153) target = $region28
      $region27: #{tpu_custom_call.1} parent=5 // pred_region
        // Predicated region
        $region29: #{tpu_custom_call.1} parent=27 // pred_check
          %p156 = pneg %p33
        $region30: #{tpu_custom_call.1} parent=27 // pred_check_branch
          %158 = sbr.rel (%p156) target = $region32
        $region31: #{tpu_custom_call.1} parent=27 // pred_region
          %p159 = scmp.lt.s32.totalorder %s13, 1
          %s160 = scalar_select %p159, %s13, 1
          %s161 = smul.addr %s160, 72
          %s162 = smul.addr %s161, 8
          %s163 = scalar_lea.vmem %s0, %s162
        $region32: #{tpu_custom_call.1} parent=27 // pred_fallthru
          _
      $region28: #{tpu_custom_call.1} parent=5 // pred_fallthru
        _
      %p164 = scmp.le.s32.totalorder 1, %s13
      %p165 = scmp.lt.s32.totalorder %s13, 3
      %p166 = pnand %p164, %p165
      %p167 = pneg %p166
      // Predicated region
      $region33: #{tpu_custom_call.1} parent=5 // pred_check
        _
      $region34: #{tpu_custom_call.1} parent=5 // pred_check_branch
        %169 = sbr.rel (%p166) target = $region36
      $region35: #{tpu_custom_call.1} parent=5 // pred_region
        %s170 = ssub.s32 %s13, 1
        %p171 = scmp.lt.s32.totalorder %s18, 1
        %s172 = scalar_select %p171, %s18, 1
        %s173 = smul.addr %s172, 72
        %s174 = smul.addr %s173, 8
        %s175 = scalar_lea.vmem %s0, %s174
        %p176 = pneg %p39
        %p177 = pneg %p36
        %p178 = pneg %p60
        %p179 = pneg %p57
        %p180 = pneg %p81
        %p181 = pneg %p78
        %p182 = pneg %p102
        %p183 = pneg %p99
        %p184 = pneg %p128
        %p185 = pneg %p125
        %s186 = sand.u32 %s115, 1
        %s187 = scalar_lea.sflag [#allocation3], %s186
        %s188 = sand.u32 %s115, 1
        %s189 = smul.addr %s188, 64
        %s190 = scalar_lea.vmem [#allocation2], %s189
        %p191 = scmp.lt.s32.totalorder %s18, 1
        %s192 = scalar_select %p191, %s18, 1
        %s193 = smul.addr %s192, 72
        %s194 = smul.addr %s193, 8
        %s195 = scalar_lea.vmem %s0, %s194
        %v196 = vld [vmem:[%s195] sm:$0xff]
        %v197 = vld [vmem:[%s195 + $0x10] sm:$0xff]
        %v198 = vld [vmem:[%s195 + $0x20] sm:$0xff]
        %v199 = vld [vmem:[%s195 + $0x30] sm:$0xff]
        %v200 = vld [vmem:[%s195 + $0x40] sm:$0xff]
        %v201 = vld [vmem:[%s195 + $0x50] sm:$0xff]
        %v202 = vld [vmem:[%s195 + $0x60] sm:$0xff]
        %v203 = vld [vmem:[%s195 + $0x70] sm:$0xff]
        %v204 = vld [vmem:[%s1] sm:$0x1]
        %v205 = vlaneseq
        %v206 = vshrl.u32 %v205, 7
        %v207 = vsub.s32 0, %v206
        %v208 = vrot.slane %v204, %v207
        %v209 = vmul.f32 %v196, %v208
        %v210 = vmul.f32 %v197, %v208
        %v211 = vmul.f32 %v198, %v208
        %v212 = vmul.f32 %v199, %v208
        %v213 = vmul.f32 %v200, %v208
        %v214 = vmul.f32 %v201, %v208
        %v215 = vmul.f32 %v202, %v208
        %v216 = vmul.f32 %v203, %v208
        %v217 = vadd.f32 %v209, 0.0
        %v218 = vadd.f32 %v210, 0.0
        %v219 = vadd.f32 %v211, 0.0
        %v220 = vadd.f32 %v212, 0.0
        %v221 = vadd.f32 %v213, 0.0
        %v222 = vadd.f32 %v214, 0.0
        %v223 = vadd.f32 %v215, 0.0
        %v224 = vadd.f32 %v216, 0.0
        %s225 = scalar_lea.vmem %s195, 144
        %v226 = vld [vmem:[%s225] sm:$0xff]
        %v227 = vld [vmem:[%s225 + $0x10] sm:$0xff]
        %v228 = vld [vmem:[%s225 + $0x20] sm:$0xff]
        %v229 = vld [vmem:[%s225 + $0x30] sm:$0xff]
        %v230 = vld [vmem:[%s225 + $0x40] sm:$0xff]
        %v231 = vld [vmem:[%s225 + $0x50] sm:$0xff]
        %v232 = vld [vmem:[%s225 + $0x60] sm:$0xff]
        %v233 = vld [vmem:[%s225 + $0x70] sm:$0xff]
        %v234 = vld [vmem:[%s1 + $0x1] sm:$0x1]
        %v235 = vlaneseq
        %v236 = vshrl.u32 %v235, 7
        %v237 = vsub.s32 0, %v236
        %v238 = vrot.slane %v234, %v237
        %v239 = vmul.f32 %v226, %v238
        %v240 = vmul.f32 %v227, %v238
        %v241 = vmul.f32 %v228, %v238
        %v242 = vmul.f32 %v229, %v238
        %v243 = vmul.f32 %v230, %v238
        %v244 = vmul.f32 %v231, %v238
        %v245 = vmul.f32 %v232, %v238
        %v246 = vmul.f32 %v233, %v238
        %v247 = vadd.f32 %v217, %v239
        %v248 = vadd.f32 %v218, %v240
        %v249 = vadd.f32 %v219, %v241
        %v250 = vadd.f32 %v220, %v242
        %v251 = vadd.f32 %v221, %v243
        %v252 = vadd.f32 %v222, %v244
        %v253 = vadd.f32 %v223, %v245
        %v254 = vadd.f32 %v224, %v246
        %v255 = vld [vmem:[%s195 + $0x1] sm:$0xff]
        %v256 = vld [vmem:[%s195 + $0x11] sm:$0xff]
        %v257 = vld [vmem:[%s195 + $0x21] sm:$0xff]
        %v258 = vld [vmem:[%s195 + $0x31] sm:$0xff]
        %v259 = vld [vmem:[%s195 + $0x41] sm:$0xff]
        %v260 = vld [vmem:[%s195 + $0x51] sm:$0xff]
        %v261 = vld [vmem:[%s195 + $0x61] sm:$0xff]
        %v262 = vld [vmem:[%s195 + $0x71] sm:$0xff]
        %v263 = vld [vmem:[%s1 + $0x2] sm:$0x1]
        %v264 = vlaneseq
        %v265 = vshrl.u32 %v264, 7
        %v266 = vsub.s32 0, %v265
        %v267 = vrot.slane %v263, %v266
        %v268 = vmul.f32 %v255, %v267
        %v269 = vmul.f32 %v256, %v267
        %v270 = vmul.f32 %v257, %v267
        %v271 = vmul.f32 %v258, %v267
        %v272 = vmul.f32 %v259, %v267
        %v273 = vmul.f32 %v260, %v267
        %v274 = vmul.f32 %v261, %v267
        %v275 = vmul.f32 %v262, %v267
        %v276 = vadd.f32 %v247, %v268
        %v277 = vadd.f32 %v248, %v269
        %v278 = vadd.f32 %v249, %v270
        %v279 = vadd.f32 %v250, %v271
        %v280 = vadd.f32 %v251, %v272
        %v281 = vadd.f32 %v252, %v273
        %v282 = vadd.f32 %v253, %v274
        %v283 = vadd.f32 %v254, %v275
        %s284 = scalar_lea.vmem %s195, 288
        %v285 = vld [vmem:[%s284] sm:$0xff]
        %v286 = vld [vmem:[%s284 + $0x10] sm:$0xff]
        %v287 = vld [vmem:[%s284 + $0x20] sm:$0xff]
        %v288 = vld [vmem:[%s284 + $0x30] sm:$0xff]
        %v289 = vld [vmem:[%s284 + $0x40] sm:$0xff]
        %v290 = vld [vmem:[%s284 + $0x50] sm:$0xff]
        %v291 = vld [vmem:[%s284 + $0x60] sm:$0xff]
        %v292 = vld [vmem:[%s284 + $0x70] sm:$0xff]
        %v293 = vld [vmem:[%s1 + $0x3] sm:$0x1]
        %v294 = vlaneseq
        %v295 = vshrl.u32 %v294, 7
        %v296 = vsub.s32 0, %v295
        %v297 = vrot.slane %v293, %v296
        %v298 = vmul.f32 %v285, %v297
        %v299 = vmul.f32 %v286, %v297
        %v300 = vmul.f32 %v287, %v297
        %v301 = vmul.f32 %v288, %v297
        %v302 = vmul.f32 %v289, %v297
        %v303 = vmul.f32 %v290, %v297
        %v304 = vmul.f32 %v291, %v297
        %v305 = vmul.f32 %v292, %v297
        %v306 = vadd.f32 %v276, %v298
        %v307 = vadd.f32 %v277, %v299
        %v308 = vadd.f32 %v278, %v300
        %v309 = vadd.f32 %v279, %v301
        %v310 = vadd.f32 %v280, %v302
        %v311 = vadd.f32 %v281, %v303
        %v312 = vadd.f32 %v282, %v304
        %v313 = vadd.f32 %v283, %v305
        %s314 = scalar_lea.vmem %s195, 432
        %v315 = vld [vmem:[%s314] sm:$0xff]
        %v316 = vld [vmem:[%s314 + $0x10] sm:$0xff]
        %v317 = vld [vmem:[%s314 + $0x20] sm:$0xff]
        %v318 = vld [vmem:[%s314 + $0x30] sm:$0xff]
        %v319 = vld [vmem:[%s314 + $0x40] sm:$0xff]
        %v320 = vld [vmem:[%s314 + $0x50] sm:$0xff]
        %v321 = vld [vmem:[%s314 + $0x60] sm:$0xff]
        %v322 = vld [vmem:[%s314 + $0x70] sm:$0xff]
        %v323 = vld [vmem:[%s1 + $0x4] sm:$0x1]
        %v324 = vlaneseq
        %v325 = vshrl.u32 %v324, 7
        %v326 = vsub.s32 0, %v325
        %v327 = vrot.slane %v323, %v326
        %v328 = vmul.f32 %v315, %v327
        %v329 = vmul.f32 %v316, %v327
        %v330 = vmul.f32 %v317, %v327
        %v331 = vmul.f32 %v318, %v327
        %v332 = vmul.f32 %v319, %v327
        %v333 = vmul.f32 %v320, %v327
        %v334 = vmul.f32 %v321, %v327
        %v335 = vmul.f32 %v322, %v327
        %v336 = vadd.f32 %v306, %v328
        %v337 = vadd.f32 %v307, %v329
        %v338 = vadd.f32 %v308, %v330
        %v339 = vadd.f32 %v309, %v331
        %v340 = vadd.f32 %v310, %v332
        %v341 = vadd.f32 %v311, %v333
        %v342 = vadd.f32 %v312, %v334
        %v343 = vadd.f32 %v313, %v335
        %v344 = vld [vmem:[%s284 + $0x1] sm:$0xff]
        %v345 = vld [vmem:[%s284 + $0x11] sm:$0xff]
        %v346 = vld [vmem:[%s284 + $0x21] sm:$0xff]
        %v347 = vld [vmem:[%s284 + $0x31] sm:$0xff]
        %v348 = vld [vmem:[%s284 + $0x41] sm:$0xff]
        %v349 = vld [vmem:[%s284 + $0x51] sm:$0xff]
        %v350 = vld [vmem:[%s284 + $0x61] sm:$0xff]
        %v351 = vld [vmem:[%s284 + $0x71] sm:$0xff]
        %v352 = vld [vmem:[%s1 + $0x5] sm:$0x1]
        %v353 = vlaneseq
        %v354 = vshrl.u32 %v353, 7
        %v355 = vsub.s32 0, %v354
        %v356 = vrot.slane %v352, %v355
        %v357 = vmul.f32 %v344, %v356
        %v358 = vmul.f32 %v345, %v356
        %v359 = vmul.f32 %v346, %v356
        %v360 = vmul.f32 %v347, %v356
        %v361 = vmul.f32 %v348, %v356
        %v362 = vmul.f32 %v349, %v356
        %v363 = vmul.f32 %v350, %v356
        %v364 = vmul.f32 %v351, %v356
        %v365 = vadd.f32 %v336, %v357
        %v366 = vadd.f32 %v337, %v358
        %v367 = vadd.f32 %v338, %v359
        %v368 = vadd.f32 %v339, %v360
        %v369 = vadd.f32 %v340, %v361
        %v370 = vadd.f32 %v341, %v362
        %v371 = vadd.f32 %v342, %v363
        %v372 = vadd.f32 %v343, %v364
        %s373 = scalar_lea.vmem %s195, 16
        %v374 = vld [vmem:[%s373] sm:$0xff]
        %v375 = vld [vmem:[%s373 + $0x10] sm:$0xff]
        %v376 = vld [vmem:[%s373 + $0x20] sm:$0xff]
        %v377 = vld [vmem:[%s373 + $0x30] sm:$0xff]
        %v378 = vld [vmem:[%s373 + $0x40] sm:$0xff]
        %v379 = vld [vmem:[%s373 + $0x50] sm:$0xff]
        %v380 = vld [vmem:[%s373 + $0x60] sm:$0xff]
        %v381 = vld [vmem:[%s373 + $0x70] sm:$0xff]
        %v382 = vld [vmem:[%s1 + $0x6] sm:$0x1]
        %v383 = vlaneseq
        %v384 = vshrl.u32 %v383, 7
        %v385 = vsub.s32 0, %v384
        %v386 = vrot.slane %v382, %v385
        %v387 = vmul.f32 %v374, %v386
        %v388 = vmul.f32 %v375, %v386
        %v389 = vmul.f32 %v376, %v386
        %v390 = vmul.f32 %v377, %v386
        %v391 = vmul.f32 %v378, %v386
        %v392 = vmul.f32 %v379, %v386
        %v393 = vmul.f32 %v380, %v386
        %v394 = vmul.f32 %v381, %v386
        %v395 = vadd.f32 %v365, %v387
        %v396 = vadd.f32 %v366, %v388
        %v397 = vadd.f32 %v367, %v389
        %v398 = vadd.f32 %v368, %v390
        %v399 = vadd.f32 %v369, %v391
        %v400 = vadd.f32 %v370, %v392
        %v401 = vadd.f32 %v371, %v393
        %v402 = vadd.f32 %v372, %v394
        %s403 = scalar_lea.vmem %s195, 160
        %v404 = vld [vmem:[%s403] sm:$0xff]
        %v405 = vld [vmem:[%s403 + $0x10] sm:$0xff]
        %v406 = vld [vmem:[%s403 + $0x20] sm:$0xff]
        %v407 = vld [vmem:[%s403 + $0x30] sm:$0xff]
        %v408 = vld [vmem:[%s403 + $0x40] sm:$0xff]
        %v409 = vld [vmem:[%s403 + $0x50] sm:$0xff]
        %v410 = vld [vmem:[%s403 + $0x60] sm:$0xff]
        %v411 = vld [vmem:[%s403 + $0x70] sm:$0xff]
        %v412 = vld [vmem:[%s1 + $0x7] sm:$0x1]
        %v413 = vlaneseq
        %v414 = vshrl.u32 %v413, 7
        %v415 = vsub.s32 0, %v414
        %v416 = vrot.slane %v412, %v415
        %v417 = vmul.f32 %v404, %v416
        %v418 = vmul.f32 %v405, %v416
        %v419 = vmul.f32 %v406, %v416
        %v420 = vmul.f32 %v407, %v416
        %v421 = vmul.f32 %v408, %v416
        %v422 = vmul.f32 %v409, %v416
        %v423 = vmul.f32 %v410, %v416
        %v424 = vmul.f32 %v411, %v416
        %v425 = vadd.f32 %v395, %v417
        %v426 = vadd.f32 %v396, %v418
        %v427 = vadd.f32 %v397, %v419
        %v428 = vadd.f32 %v398, %v420
        %v429 = vadd.f32 %v399, %v421
        %v430 = vadd.f32 %v400, %v422
        %v431 = vadd.f32 %v401, %v423
        %v432 = vadd.f32 %v402, %v424
        %v433 = vld [vmem:[%s373 + $0x1] sm:$0xff]
        %v434 = vld [vmem:[%s373 + $0x11] sm:$0xff]
        %v435 = vld [vmem:[%s373 + $0x21] sm:$0xff]
        %v436 = vld [vmem:[%s373 + $0x31] sm:$0xff]
        %v437 = vld [vmem:[%s373 + $0x41] sm:$0xff]
        %v438 = vld [vmem:[%s373 + $0x51] sm:$0xff]
        %v439 = vld [vmem:[%s373 + $0x61] sm:$0xff]
        %v440 = vld [vmem:[%s373 + $0x71] sm:$0xff]
        %v441 = vld [vmem:[%s1 + $0x8] sm:$0x1]
        %v442 = vlaneseq
        %v443 = vshrl.u32 %v442, 7
        %v444 = vsub.s32 0, %v443
        %v445 = vrot.slane %v441, %v444
        %v446 = vmul.f32 %v433, %v445
        %v447 = vmul.f32 %v434, %v445
        %v448 = vmul.f32 %v435, %v445
        %v449 = vmul.f32 %v436, %v445
        %v450 = vmul.f32 %v437, %v445
        %v451 = vmul.f32 %v438, %v445
        %v452 = vmul.f32 %v439, %v445
        %v453 = vmul.f32 %v440, %v445
        %v454 = vadd.f32 %v425, %v446
        %v455 = vadd.f32 %v426, %v447
        %v456 = vadd.f32 %v427, %v448
        %v457 = vadd.f32 %v428, %v449
        %v458 = vadd.f32 %v429, %v450
        %v459 = vadd.f32 %v430, %v451
        %v460 = vadd.f32 %v431, %v452
        %v461 = vadd.f32 %v432, %v453
        %v462 = vld [vmem:[%s2] sm:$0xff]
        %v463 = vld [vmem:[%s2 + $0x8] sm:$0xff]
        %v464 = vld [vmem:[%s2 + $0x10] sm:$0xff]
        %v465 = vld [vmem:[%s2 + $0x18] sm:$0xff]
        %v466 = vld [vmem:[%s2 + $0x20] sm:$0xff]
        %v467 = vld [vmem:[%s2 + $0x28] sm:$0xff]
        %v468 = vld [vmem:[%s2 + $0x30] sm:$0xff]
        %v469 = vld [vmem:[%s2 + $0x38] sm:$0xff]
        %v470 = vld [vmem:[%s2 + $0x40] sm:$0xff]
        %v471 = vld [vmem:[%s2 + $0x48] sm:$0xff]
        %v472 = vld [vmem:[%s2 + $0x50] sm:$0xff]
        %v473 = vld [vmem:[%s2 + $0x58] sm:$0xff]
        %v474 = vld [vmem:[%s2 + $0x60] sm:$0xff]
        %v475 = vld [vmem:[%s2 + $0x68] sm:$0xff]
        %v476 = vld [vmem:[%s2 + $0x70] sm:$0xff]
        %v477 = vld [vmem:[%s2 + $0x78] sm:$0xff]
        %v478 = vld [vmem:[%s3] sm:$0x1]
        %v480 = vlaneseq
        %v481 = vshrl.u32 %v480, 7
        %v482 = vsub.s32 0, %v481
        %v483 = vrot.slane %v478, %v482
        %485 = vmatprep.subr.mxu0 0.0
        %486 = vmatpush1.msra.mxu0 %v462
        %487 = vmatprep.subr.mxu0 0.0
        %488 = vmatpush1.msra.mxu0 %v463
        %489 = vmatprep.subr.mxu0 0.0
        %490 = vmatpush1.msra.mxu0 %v464
        %491 = vmatprep.subr.mxu0 0.0
        %492 = vmatpush1.msra.mxu0 %v465
        %493 = vmatprep.subr.mxu0 0.0
        %494 = vmatpush1.msra.mxu0 %v466
        %495 = vmatprep.subr.mxu0 0.0
        %496 = vmatpush1.msra.mxu0 %v467
        %497 = vmatprep.subr.mxu0 0.0
        %498 = vmatpush1.msra.mxu0 %v468
        %499 = vmatprep.subr.mxu0 0.0
        %500 = vmatpush1.msra.mxu0 %v469
        %501 = vmatprep.subr.mxu0 0.0
        %502 = vmatpush1.msra.mxu0 %v470
        %503 = vmatprep.subr.mxu0 0.0
        %504 = vmatpush1.msra.mxu0 %v471
        %505 = vmatprep.subr.mxu0 0.0
        %506 = vmatpush1.msra.mxu0 %v472
        %507 = vmatprep.subr.mxu0 0.0
        %508 = vmatpush1.msra.mxu0 %v473
        %509 = vmatprep.subr.mxu0 0.0
        %510 = vmatpush1.msra.mxu0 %v474
        %511 = vmatprep.subr.mxu0 0.0
        %512 = vmatpush1.msra.mxu0 %v475
        %513 = vmatprep.subr.mxu0 0.0
        %514 = vmatpush1.msra.mxu0 %v476
        %515 = vmatprep.subr.mxu0 0.0
        %516 = vmatpush1.msra.mxu0 %v477
        %517 = vmatprep.subr.mxu0 0.0
        %518 = vmatpush1.msra.mxu0 0.0
        %519 = vmatprep.subr.mxu0 0.0
        %520 = vmatpush1.msra.mxu0 0.0
        %521 = vmatprep.subr.mxu0 0.0
        %522 = vmatpush1.msra.mxu0 0.0
        %523 = vmatprep.subr.mxu0 0.0
        %524 = vmatpush1.msra.mxu0 0.0
        %525 = vmatprep.subr.mxu0 0.0
        %526 = vmatpush1.msra.mxu0 0.0
        %527 = vmatprep.subr.mxu0 0.0
        %528 = vmatpush1.msra.mxu0 0.0
        %529 = vmatprep.subr.mxu0 0.0
        %530 = vmatpush1.msra.mxu0 0.0
        %531 = vmatprep.subr.mxu0 0.0
        %532 = vmatpush1.msra.mxu0 0.0
        %533 = vmatprep.subr.mxu0 0.0
        %534 = vmatpush1.msra.mxu0 0.0
        %535 = vmatprep.subr.mxu0 0.0
        %536 = vmatpush1.msra.mxu0 0.0
        %537 = vmatprep.subr.mxu0 0.0
        %538 = vmatpush1.msra.mxu0 0.0
        %539 = vmatprep.subr.mxu0 0.0
        %540 = vmatpush1.msra.mxu0 0.0
        %541 = vmatprep.subr.mxu0 0.0
        %542 = vmatpush1.msra.mxu0 0.0
        %543 = vmatprep.subr.mxu0 0.0
        %544 = vmatpush1.msra.mxu0 0.0
        %545 = vmatprep.subr.mxu0 0.0
        %546 = vmatpush1.msra.mxu0 0.0
        %547 = vmatprep.subr.mxu0 0.0
        %548 = vmatpush1.msra.mxu0 0.0
        %549 = vmatprep.mubr.f32.mxu0 0.0
        %550 = vmatmul.mubr.f32.gmra.mrb[0].mxu0 %v454
        %v551 = vpop.f32.mrb[0].mxu0
        %v552 = vadd.f32 %v483, %v551
        %v553 = vpop.f32.mrb[0].mxu0
        %554 = vmatprep.mubr.f32.mxu0 0.0
        %555 = vmatmul.mubr.f32.gmra.mrb[0].mxu0 %v455
        %v556 = vpop.f32.mrb[0].mxu0
        %v557 = vadd.f32 %v483, %v556
        %v558 = vpop.f32.mrb[0].mxu0
        %559 = vmatprep.mubr.f32.mxu0 0.0
        %560 = vmatmul.mubr.f32.gmra.mrb[0].mxu0 %v456
        %v561 = vpop.f32.mrb[0].mxu0
        %v562 = vadd.f32 %v483, %v561
        %v563 = vpop.f32.mrb[0].mxu0
        %564 = vmatprep.mubr.f32.mxu0 0.0
        %565 = vmatmul.mubr.f32.gmra.mrb[0].mxu0 %v457
        %v566 = vpop.f32.mrb[0].mxu0
        %v567 = vadd.f32 %v483, %v566
        %v568 = vpop.f32.mrb[0].mxu0
        %569 = vmatprep.mubr.f32.mxu0 0.0
        %570 = vmatmul.mubr.f32.gmra.mrb[0].mxu0 %v458
        %v571 = vpop.f32.mrb[0].mxu0
        %v572 = vadd.f32 %v483, %v571
        %v573 = vpop.f32.mrb[0].mxu0
        %574 = vmatprep.mubr.f32.mxu0 0.0
        %575 = vmatmul.mubr.f32.gmra.mrb[0].mxu0 %v459
        %v576 = vpop.f32.mrb[0].mxu0
        %v577 = vadd.f32 %v483, %v576
        %v578 = vpop.f32.mrb[0].mxu0
        %579 = vmatprep.mubr.f32.mxu0 0.0
        %580 = vmatmul.mubr.f32.gmra.mrb[0].mxu0 %v460
        %v581 = vpop.f32.mrb[0].mxu0
        %v582 = vadd.f32 %v483, %v581
        %v583 = vpop.f32.mrb[0].mxu0
        %584 = vmatprep.mubr.f32.mxu0 0.0
        %585 = vmatmul.mubr.f32.gmra.mrb[0].mxu0 %v461
        %v586 = vpop.f32.mrb[0].mxu0
        %v587 = vadd.f32 %v483, %v586
        %v588 = vpop.f32.mrb[0].mxu0
        %589 = vdwg.mxu0
        %590 = vst [vmem:[%s190] sm:$0xff] %v552
        %591 = vst [vmem:[%s190 + $0x8] sm:$0xff] %v557
        %592 = vst [vmem:[%s190 + $0x10] sm:$0xff] %v562
        %593 = vst [vmem:[%s190 + $0x18] sm:$0xff] %v567
        %594 = vst [vmem:[%s190 + $0x20] sm:$0xff] %v572
        %595 = vst [vmem:[%s190 + $0x28] sm:$0xff] %v577
        %596 = vst [vmem:[%s190 + $0x30] sm:$0xff] %v582
        %597 = vst [vmem:[%s190 + $0x38] sm:$0xff] %v587
        %s598 = sand.u32 %s115, 1
        %s599 = scalar_lea.sflag [#allocation3], %s598
        %s600 = sand.u32 %s115, 1
        %s601 = smul.addr %s600, 64
        %s602 = scalar_lea.vmem [#allocation2], %s601
        // Predicated region
        $region37: #{tpu_custom_call.1} parent=35 // pred_check
          %p603 = pneg %p125
        $region38: #{tpu_custom_call.1} parent=35 // pred_check_branch
          %605 = sbr.rel (%p603) target = $region40
        $region39: #{tpu_custom_call.1} parent=35 // pred_region
          %s607 = ssub.s32 1024, 1024
          %608 = vsyncadd %s599, %s607
          %s609 = smul.addr %s18, 8
          %s610 = smul.addr %s609, 128
          %s611 = scalar_lea.hbm %s4, %s610
          %s612 = sshll.u32 %s602, 4
          %s613 = int_to_ptr.vmem [resolvable:$true] %s612
          %618 = dma.vmem_to_hbm [thread:$0]  %s613, 1024, %s611, %s599, 128, 128, 8
        $region40: #{tpu_custom_call.1} parent=35 // pred_fallthru
          _
      $region36: #{tpu_custom_call.1} parent=5 // pred_fallthru
        _
      %p619 = scmp.le.s32.totalorder 2, %s13
      // Predicated region
      $region41: #{tpu_custom_call.1} parent=5 // pred_check
        %p620 = pneg %p619
      $region42: #{tpu_custom_call.1} parent=5 // pred_check_branch
        %622 = sbr.rel (%p620) target = $region44
      $region43: #{tpu_custom_call.1} parent=5 // pred_region
        %s623 = ssub.s32 %s13, 2
        // Predicated region
        $region45: #{tpu_custom_call.1} parent=43 // pred_check
          %p624 = pneg %p131
        $region46: #{tpu_custom_call.1} parent=43 // pred_check_branch
          %626 = sbr.rel (%p624) target = $region48
        $region47: #{tpu_custom_call.1} parent=43 // pred_region
          %s627 = sand.u32 %s116, 1
          %s628 = scalar_lea.sflag [#allocation3], %s627
          %s629 = sand.u32 %s116, 1
          %s630 = smul.addr %s629, 64
          %s631 = scalar_lea.vmem [#allocation2], %s630
          %632 = dma.done %s628, 1024
        $region48: #{tpu_custom_call.1} parent=43 // pred_fallthru
          _
      $region44: #{tpu_custom_call.1} parent=5 // pred_fallthru
        _
    $region6: #{tpu_custom_call.1} parent=1 // loop_footer
      %s17 = sadd.s32 1, %s13
    $region7: #{tpu_custom_call.1} parent=1 // loop_footer_branch
      %12 = sbr.rel target = $region3
    $region8: #{tpu_custom_call.1} parent=1 // loop_exit
      _
    %633 = vsyncpa [#allocation3], 1
    %s634 = scalar_lea.sflag [#allocation3], 1
    %635 = vsyncpa %s634, 1

</llo_original>
